<compile_context>
chip_gen: v6e
topology: v6e:2x2x1
jax: 0.10.0
libtpu: 0.0.40
codegen_flags: <defaults>
</compile_context>

<pallas_src>
import functools

import jax
import jax.numpy as jnp
from jax.experimental import pallas as pl
from jax.experimental.pallas import tpu as pltpu


def _round_up(v, m):
    return ((v + m - 1) // m) * m


def _ce_ls_kernel(logits_ref, targets_ref, out_ref,
                  m_ref, s_ref, sumx_ref, tgt_ref,
                  *, epsilon, num_classes, batch, block_b, block_k,
                  mask_rows, mask_cols):
    i = pl.program_id(0)            # batch-tile index ("parallel")
    kk = pl.program_id(1)           # class-tile index ("arbitrary", innermost)
    nk = pl.num_programs(1)

    @pl.when(kk == 0)
    def _init():
        m_ref[...] = jnp.full(m_ref.shape, -jnp.inf, jnp.float32)
        s_ref[...] = jnp.zeros(s_ref.shape, jnp.float32)
        sumx_ref[...] = jnp.zeros(sumx_ref.shape, jnp.float32)
        tgt_ref[...] = jnp.zeros(tgt_ref.shape, jnp.float32)

    x_nat = logits_ref[...]                       # (TB, TK) native dtype
    labels = targets_ref[...]                     # (TB, 1)  int32
    tb, tk = x_nat.shape

    # (1, TK) class-index iota; broadcasts against (TB, 1) labels.
    col = jax.lax.broadcasted_iota(jnp.int32, (1, tk), 1) + kk * block_k
    col_ok = col < num_classes                    # (1, TK) bool

    # Running-max update. max/compare are exact in the native dtype (cheap
    # bf16 vregs on v6e/v7x); cast to f32 only afterwards.
    if mask_cols:
        x_for_max = jnp.where(col_ok, x_nat, -jnp.inf)
    else:
        x_for_max = x_nat
    tile_max = jnp.max(x_for_max, axis=1, keepdims=True).astype(jnp.float32)
    m_old = m_ref[...]
    m_new = jnp.maximum(m_old, tile_max)          # (TB, 1)

    x = x_nat.astype(jnp.float32)                 # (TB, TK) f32 compute copy
    shifted = x - m_new
    if mask_cols:
        shifted = jnp.where(col_ok, shifted, -jnp.inf)   # exp(-inf) == 0
        x_valid = jnp.where(col_ok, x, 0.0)
    else:
        x_valid = x
    e = jnp.exp(shifted)                          # (TB, TK)

    alpha = jnp.exp(m_old - m_new)                # (TB, 1); == 0 on first tile
    s_ref[...] = alpha * s_ref[...] + jnp.sum(e, axis=1, keepdims=True)
    sumx_ref[...] += jnp.sum(x_valid, axis=1, keepdims=True)
    # Target logit: label matches at most one (valid) column across all tiles.
    tgt_ref[...] += jnp.sum(jnp.where(col == labels, x, 0.0),
                            axis=1, keepdims=True)
    m_ref[...] = m_new

    @pl.when(kk == nk - 1)
    def _finalize():
        lse = m_ref[...] + jnp.log(s_ref[...])                    # (TB, 1)
        tgt_lp = tgt_ref[...] - lse                               # log p[target]
        sum_lp = sumx_ref[...] - float(num_classes) * lse         # sum_j log p[j]
        row_loss = (-(1.0 - epsilon) * tgt_lp
                    - (epsilon / float(num_classes)) * sum_lp)    # (TB, 1)
        if mask_rows:
            row = jax.lax.broadcasted_iota(jnp.int32, (tb, 1), 0) + i * block_b
            # Keep this a select: padded rows may carry Inf/NaN accumulators.
            row_loss = jnp.where(row < batch, row_loss, 0.0)
        partial = jnp.sum(row_loss)                               # scalar f32
        out_ref[...] = jnp.zeros(out_ref.shape, jnp.float32) + partial


def cross_entropy_label_smooth(inputs, targets, num_classes, epsilon=0.1,
                               block_b=None, block_k=None):
    """inputs: (B, K) float logits (any float dtype), targets: (B,) int labels -> scalar f32."""
    B, K = inputs.shape
    assert K == num_classes
    itemsize = jnp.dtype(inputs.dtype).itemsize
    row_align = 16 if itemsize < 4 else 8

    # --- VMEM budget (per generation) ---------------------------------------
    try:
        vmem_cap = int(pltpu.get_tpu_info().vmem_capacity_bytes)
    except Exception:
        vmem_cap = 64 << 20                     # conservative (v7x) fallback
    # Headroom for compiler scratch / output / semaphores; the rest is tile budget.
    tile_budget = max((vmem_cap * 3) // 4 - (8 << 20), 8 << 20)
    # Per logits-tile element: 2 double-buffered DMA copies (native dtype)
    # + ~3 live f32 temporaries (cast copy, shifted/masked, exp).
    per_elem = 2 * itemsize + 3 * 4

    # --- default tile sizes ---------------------------------------------------
    if block_b is None or block_k is None:
        max_rows_full_k = tile_budget // (K * per_elem)
        if max_rows_full_k >= min(256, _round_up(B, row_align)):
            d_block_k = K                       # whole class dim in one tile
            d_block_b = min(int(max_rows_full_k), 4096)
        else:
            # Large-vocab path: tile K, online logsumexp across class tiles.
            d_block_b = 256
            d_block_k = (int(tile_budget // (d_block_b * per_elem)) // 128) * 128
            d_block_k = max(min(d_block_k, (K // 128) * 128), 128)
        if block_b is None:
            block_b = d_block_b
        if block_k is None:
            block_k = d_block_k

    # --- normalize to legal, aligned tiles ------------------------------------
    if B <= row_align:
        block_b = B                             # full batch dim (always legal)
    else:
        block_b = min(int(block_b), (B // row_align) * row_align, 4096)
        block_b = max((block_b // row_align) * row_align, row_align)
    block_k = int(block_k)
    if block_k != K:
        block_k = max(min((block_k // 128) * 128, (K // 128) * 128), 128)
        if block_k >= K:
            block_k = K

    nb = pl.cdiv(B, block_b)
    nk = pl.cdiv(K, block_k)
    mask_rows = (B % block_b) != 0
    mask_cols = (K % block_k) != 0

    tile_bytes = block_b * block_k * per_elem
    vmem_limit = int(min(max(tile_bytes + (8 << 20), 32 << 20),
                         max(vmem_cap - (8 << 20), 32 << 20)))

    targets2d = targets.astype(jnp.int32).reshape(B, 1)

    kernel = functools.partial(
        _ce_ls_kernel,
        epsilon=float(epsilon),
        num_classes=int(num_classes),
        batch=int(B),
        block_b=int(block_b),
        block_k=int(block_k),
        mask_rows=bool(mask_rows),
        mask_cols=bool(mask_cols),
    )

    cost = pl.CostEstimate(
        flops=int(6 * B * K),
        transcendentals=int(B * K),
        bytes_accessed=int(B * K * itemsize + B * 4 + nb * 8 * 128 * 4),
    )

    partials = pl.pallas_call(
        kernel,
        out_shape=jax.ShapeDtypeStruct((nb, 8, 128), jnp.float32),
        grid_spec=pltpu.PrefetchScalarGridSpec(
            num_scalar_prefetch=0,
            grid=(nb, nk),
            in_specs=[
                pl.BlockSpec((block_b, block_k), lambda i, kk: (i, kk)),  # logits
                pl.BlockSpec((block_b, 1), lambda i, kk: (i, 0)),         # labels
            ],
            out_specs=pl.BlockSpec((1, 8, 128), lambda i, kk: (i, 0, 0)),
            scratch_shapes=[pltpu.VMEM((block_b, 1), jnp.float32)] * 4,
        ),
        compiler_params=pltpu.CompilerParams(
            dimension_semantics=("parallel", "arbitrary"),
            vmem_limit_bytes=vmem_limit,
        ),
        cost_estimate=cost,
    )(inputs, targets2d)

    # Tiny final reduction in the wrapper (mean over the true batch size).
    return jnp.sum(partials[:, 0, 0]) / float(B)


def _reference(inputs, targets, num_classes, epsilon=0.1):
    log_probs = jax.nn.log_softmax(inputs.astype(jnp.float32), axis=1)
    onehot = jax.nn.one_hot(targets, num_classes, dtype=jnp.float32)
    smooth = (1.0 - epsilon) * onehot + epsilon / num_classes
    return jnp.sum(jnp.mean(-smooth * log_probs, axis=0))


if __name__ == "__main__":
    epsilon = 0.1
    key = jax.random.PRNGKey(0)
    k1, k2, k3, k4, k5, k6 = jax.random.split(key, 6)

    # Test 1: small f32 problem, single tile (default tiling).
    num_classes, batch = 32, 8
    inputs = jax.random.normal(k1, (batch, num_classes), dtype=jnp.float32)
    targets = jax.random.randint(k2, (batch,), 0, num_classes, dtype=jnp.int32)
    loss = jax.block_until_ready(
        cross_entropy_label_smooth(inputs, targets, num_classes, epsilon))
    ref = _reference(inputs, targets, num_classes, epsilon)
    assert jnp.allclose(loss, ref, atol=2e-5, rtol=2e-5), (loss, ref)

    # Test 2: bf16 logits, multiple batch tiles with a partial final tile.
    num_classes2, batch2 = 128, 20
    inputs2 = jax.random.normal(k3, (batch2, num_classes2), dtype=jnp.bfloat16)
    targets2 = jax.random.randint(k4, (batch2,), 0, num_classes2, dtype=jnp.int32)
    loss2 = jax.block_until_ready(
        cross_entropy_label_smooth(inputs2, targets2, num_classes2, epsilon,
                                   block_b=16))
    ref2 = _reference(inputs2, targets2, num_classes2, epsilon)
    assert jnp.allclose(loss2, ref2, atol=1e-4, rtol=1e-4), (loss2, ref2)

    # Test 3: K-tiled online-logsumexp path with partial tiles on BOTH axes.
    num_classes3, batch3 = 640, 24
    inputs3 = jax.random.normal(k5, (batch3, num_classes3), dtype=jnp.float32)
    targets3 = jax.random.randint(k6, (batch3,), 0, num_classes3, dtype=jnp.int32)
    loss3 = jax.block_until_ready(
        cross_entropy_label_smooth(inputs3, targets3, num_classes3, epsilon,
                                   block_b=16, block_k=256))
    ref3 = _reference(inputs3, targets3, num_classes3, epsilon)
    assert jnp.allclose(loss3, ref3, atol=2e-5, rtol=2e-5), (loss3, ref3)

    print("KERNEL_OK")
</pallas_src>

<mosaic_0001>
module attributes {stable_mosaic.version = 11 : i64} {
  func.func @_ce_ls_kernel(%arg0: i32, %arg1: i32, %arg2: memref<8x32xf32, #tpu.memory_space<vmem>>, %arg3: memref<8x1xi32, #tpu.memory_space<vmem>>, %arg4: memref<1x8x128xf32, #tpu.memory_space<vmem>>, %arg5: memref<8x1xf32, #tpu.memory_space<vmem>>, %arg6: memref<8x1xf32, #tpu.memory_space<vmem>>, %arg7: memref<8x1xf32, #tpu.memory_space<vmem>>, %arg8: memref<8x1xf32, #tpu.memory_space<vmem>>) attributes {dimension_semantics = [#tpu.dimension_semantics<parallel>, #tpu.dimension_semantics<arbitrary>], iteration_bounds = array<i64: 1, 1>, scalar_prefetch = 0 : i64, scratch_operands = 4 : i64, tpu.core_type = #tpu.core_type<tc>, window_params = [{transform_indices = @transform_0, window_bounds = array<i64: 8, 32>}, {transform_indices = @transform_1, window_bounds = array<i64: 8, 1>}, {transform_indices = @transform_2, window_bounds = array<i64: 1, 8, 128>}]} {
    %c0_i32 = arith.constant 0 : i32
    %0 = arith.cmpi eq, %arg1, %c0_i32 : i32
    %1 = arith.extui %0 : i1 to i32
    %c0_i32_0 = arith.constant 0 : i32
    %2 = arith.cmpi ne, %1, %c0_i32_0 : i32
    scf.if %2 {
      %cst_26 = arith.constant 0xFF800000 : f32
      %43 = vector.broadcast %cst_26 : f32 to vector<8x1xf32>
      %c0_27 = arith.constant 0 : index
      %c0_28 = arith.constant 0 : index
      %44 = vector.load %arg5[%c0_27, %c0_28] : memref<8x1xf32, #tpu.memory_space<vmem>>, vector<8x1xf32>
      tpu.vector_store %arg5[%c0_27, %c0_28], %43 {strides = array<i32>} : memref<8x1xf32, #tpu.memory_space<vmem>>, vector<8x1xf32>,
      %cst_29 = arith.constant 0.000000e+00 : f32
      %45 = vector.broadcast %cst_29 : f32 to vector<8x1xf32>
      %c0_30 = arith.constant 0 : index
      %c0_31 = arith.constant 0 : index
      %46 = vector.load %arg6[%c0_30, %c0_31] : memref<8x1xf32, #tpu.memory_space<vmem>>, vector<8x1xf32>
      tpu.vector_store %arg6[%c0_30, %c0_31], %45 {strides = array<i32>} : memref<8x1xf32, #tpu.memory_space<vmem>>, vector<8x1xf32>,
      %cst_32 = arith.constant 0.000000e+00 : f32
      %47 = vector.broadcast %cst_32 : f32 to vector<8x1xf32>
      %c0_33 = arith.constant 0 : index
      %c0_34 = arith.constant 0 : index
      %48 = vector.load %arg7[%c0_33, %c0_34] : memref<8x1xf32, #tpu.memory_space<vmem>>, vector<8x1xf32>
      tpu.vector_store %arg7[%c0_33, %c0_34], %47 {strides = array<i32>} : memref<8x1xf32, #tpu.memory_space<vmem>>, vector<8x1xf32>,
      %cst_35 = arith.constant 0.000000e+00 : f32
      %49 = vector.broadcast %cst_35 : f32 to vector<8x1xf32>
      %c0_36 = arith.constant 0 : index
      %c0_37 = arith.constant 0 : index
      %50 = vector.load %arg8[%c0_36, %c0_37] : memref<8x1xf32, #tpu.memory_space<vmem>>, vector<8x1xf32>
      tpu.vector_store %arg8[%c0_36, %c0_37], %49 {strides = array<i32>} : memref<8x1xf32, #tpu.memory_space<vmem>>, vector<8x1xf32>,
    } else {
    }
    %c0 = arith.constant 0 : index
    %c0_1 = arith.constant 0 : index
    %3 = vector.load %arg2[%c0, %c0_1] : memref<8x32xf32, #tpu.memory_space<vmem>>, vector<8x32xf32>
    %c0_2 = arith.constant 0 : index
    %c0_3 = arith.constant 0 : index
    %4 = vector.load %arg3[%c0_2, %c0_3] : memref<8x1xi32, #tpu.memory_space<vmem>>, vector<8x1xi32>
    %5 = tpu.iota {dimensions = array<i32: 1>} : vector<1x32xi32>
    %c32_i32 = arith.constant 32 : i32
    %6 = arith.muli %arg1, %c32_i32 : i32
    %7 = vector.broadcast %6 : i32 to vector<1x32xi32>
    %8 = arith.addi %5, %7 : vector<1x32xi32>
    %cst = arith.constant dense<0xFF800000> : vector<8xf32>
    %9 = vector.multi_reduction <maximumf>, %3, %cst [1] : vector<8x32xf32> to vector<8xf32>
    %10 = vector.shape_cast %9 : vector<8xf32> to vector<8x1xf32>
    %c0_4 = arith.constant 0 : index
    %c0_5 = arith.constant 0 : index
    %11 = vector.load %arg5[%c0_4, %c0_5] : memref<8x1xf32, #tpu.memory_space<vmem>>, vector<8x1xf32>
    %12 = arith.maximumf %11, %10 : vector<8x1xf32>
    %13 = vector.broadcast %12 : vector<8x1xf32> to vector<8x32xf32>
    %14 = arith.subf %3, %13 : vector<8x32xf32>
    %15 = math.exp %14 : vector<8x32xf32>
    %16 = arith.subf %11, %12 : vector<8x1xf32>
    %17 = math.exp %16 : vector<8x1xf32>
    %c0_6 = arith.constant 0 : index
    %c0_7 = arith.constant 0 : index
    %18 = vector.load %arg6[%c0_6, %c0_7] : memref<8x1xf32, #tpu.memory_space<vmem>>, vector<8x1xf32>
    %19 = arith.mulf %17, %18 : vector<8x1xf32>
    %cst_8 = arith.constant dense<0.000000e+00> : vector<8xf32>
    %20 = vector.multi_reduction <add>, %15, %cst_8 [1] : vector<8x32xf32> to vector<8xf32>
    %21 = vector.shape_cast %20 : vector<8xf32> to vector<8x1xf32>
    %22 = arith.addf %19, %21 : vector<8x1xf32>
    %c0_9 = arith.constant 0 : index
    %c0_10 = arith.constant 0 : index
    %23 = vector.load %arg6[%c0_9, %c0_10] : memref<8x1xf32, #tpu.memory_space<vmem>>, vector<8x1xf32>
    tpu.vector_store %arg6[%c0_9, %c0_10], %22 {strides = array<i32>} : memref<8x1xf32, #tpu.memory_space<vmem>>, vector<8x1xf32>,
    %c0_11 = arith.constant 0 : index
    %c0_12 = arith.constant 0 : index
    %24 = vector.load %arg7[%c0_11, %c0_12] : memref<8x1xf32, #tpu.memory_space<vmem>>, vector<8x1xf32>
    %cst_13 = arith.constant dense<0.000000e+00> : vector<8xf32>
    %25 = vector.multi_reduction <add>, %3, %cst_13 [1] : vector<8x32xf32> to vector<8xf32>
    %26 = vector.shape_cast %25 : vector<8xf32> to vector<8x1xf32>
    %27 = arith.addf %24, %26 : vector<8x1xf32>
    %c0_14 = arith.constant 0 : index
    %c0_15 = arith.constant 0 : index
    %28 = vector.load %arg7[%c0_14, %c0_15] : memref<8x1xf32, #tpu.memory_space<vmem>>, vector<8x1xf32>
    tpu.vector_store %arg7[%c0_14, %c0_15], %27 {strides = array<i32>} : memref<8x1xf32, #tpu.memory_space<vmem>>, vector<8x1xf32>,
    %c0_16 = arith.constant 0 : index
    %c0_17 = arith.constant 0 : index
    %29 = vector.load %arg8[%c0_16, %c0_17] : memref<8x1xf32, #tpu.memory_space<vmem>>, vector<8x1xf32>
    %30 = vector.broadcast %8 : vector<1x32xi32> to vector<8x32xi32>
    %31 = vector.broadcast %4 : vector<8x1xi32> to vector<8x32xi32>
    %32 = arith.cmpi eq, %30, %31 : vector<8x32xi32>
    %cst_18 = arith.constant 0.000000e+00 : f32
    %33 = vector.broadcast %cst_18 : f32 to vector<8x32xf32>
    %34 = arith.select %32, %3, %33 : vector<8x32xi1>, vector<8x32xf32>
    %cst_19 = arith.constant dense<0.000000e+00> : vector<8xf32>
    %35 = vector.multi_reduction <add>, %34, %cst_19 [1] : vector<8x32xf32> to vector<8xf32>
    %36 = vector.shape_cast %35 : vector<8xf32> to vector<8x1xf32>
    %37 = arith.addf %29, %36 : vector<8x1xf32>
    %c0_20 = arith.constant 0 : index
    %c0_21 = arith.constant 0 : index
    %38 = vector.load %arg8[%c0_20, %c0_21] : memref<8x1xf32, #tpu.memory_space<vmem>>, vector<8x1xf32>
    tpu.vector_store %arg8[%c0_20, %c0_21], %37 {strides = array<i32>} : memref<8x1xf32, #tpu.memory_space<vmem>>, vector<8x1xf32>,
    %c0_22 = arith.constant 0 : index
    %c0_23 = arith.constant 0 : index
    %39 = vector.load %arg5[%c0_22, %c0_23] : memref<8x1xf32, #tpu.memory_space<vmem>>, vector<8x1xf32>
    tpu.vector_store %arg5[%c0_22, %c0_23], %12 {strides = array<i32>} : memref<8x1xf32, #tpu.memory_space<vmem>>, vector<8x1xf32>,
    %c0_i32_24 = arith.constant 0 : i32
    %40 = arith.cmpi eq, %arg1, %c0_i32_24 : i32
    %41 = arith.extui %40 : i1 to i32
    %c0_i32_25 = arith.constant 0 : i32
    %42 = arith.cmpi ne, %41, %c0_i32_25 : i32
    scf.if %42 {
      %c0_26 = arith.constant 0 : index
      %c0_27 = arith.constant 0 : index
      %43 = vector.load %arg5[%c0_26, %c0_27] : memref<8x1xf32, #tpu.memory_space<vmem>>, vector<8x1xf32>
      %c0_28 = arith.constant 0 : index
      %c0_29 = arith.constant 0 : index
      %44 = vector.load %arg6[%c0_28, %c0_29] : memref<8x1xf32, #tpu.memory_space<vmem>>, vector<8x1xf32>
      %45 = math.log %44 : vector<8x1xf32>
      %46 = arith.addf %43, %45 : vector<8x1xf32>
      %c0_30 = arith.constant 0 : index
      %c0_31 = arith.constant 0 : index
      %47 = vector.load %arg8[%c0_30, %c0_31] : memref<8x1xf32, #tpu.memory_space<vmem>>, vector<8x1xf32>
      %48 = arith.subf %47, %46 : vector<8x1xf32>
      %c0_32 = arith.constant 0 : index
      %c0_33 = arith.constant 0 : index
      %49 = vector.load %arg7[%c0_32, %c0_33] : memref<8x1xf32, #tpu.memory_space<vmem>>, vector<8x1xf32>
      %cst_34 = arith.constant 3.200000e+01 : f32
      %50 = vector.broadcast %cst_34 : f32 to vector<8x1xf32>
      %51 = arith.mulf %50, %46 : vector<8x1xf32>
      %52 = arith.subf %49, %51 : vector<8x1xf32>
      %cst_35 = arith.constant -0.899999976 : f32
      %53 = vector.broadcast %cst_35 : f32 to vector<8x1xf32>
      %54 = arith.mulf %53, %48 : vector<8x1xf32>
      %cst_36 = arith.constant 3.125000e-03 : f32
      %55 = vector.broadcast %cst_36 : f32 to vector<8x1xf32>
      %56 = arith.mulf %55, %52 : vector<8x1xf32>
      %57 = arith.subf %54, %56 : vector<8x1xf32>
      %58 = vector.shape_cast %57 : vector<8x1xf32> to vector<1x8x1xf32>
      %cst_37 = arith.constant dense<0.000000e+00> : vector<1xf32>
      %59 = vector.multi_reduction <add>, %58, %cst_37 [1, 2] : vector<1x8x1xf32> to vector<1xf32>
      %60 = vector.shape_cast %59 : vector<1xf32> to vector<1x1x1xf32>
      %61 = vector.extract %60[0, 0, 0] : f32 from vector<1x1x1xf32>
      %cst_38 = arith.constant 0.000000e+00 : f32
      %62 = vector.broadcast %cst_38 : f32 to vector<1x8x128xf32>
      %63 = vector.broadcast %61 : f32 to vector<1x8x128xf32>
      %64 = arith.addf %62, %63 : vector<1x8x128xf32>
      %c0_39 = arith.constant 0 : index
      %c0_40 = arith.constant 0 : index
      %c0_41 = arith.constant 0 : index
      %65 = vector.load %arg4[%c0_39, %c0_40, %c0_41] : memref<1x8x128xf32, #tpu.memory_space<vmem>>, vector<1x8x128xf32>
      tpu.vector_store %arg4[%c0_39, %c0_40, %c0_41], %64 {strides = array<i32>} : memref<1x8x128xf32, #tpu.memory_space<vmem>>, vector<1x8x128xf32>,
    } else {
    }
    return
  }
  func.func @transform_0(%arg0: i32, %arg1: i32) -> (i32, i32) {
    %c0_i32 = arith.constant 0 : i32
    return %arg0, %arg1 : i32, i32
  }
  func.func @transform_1(%arg0: i32, %arg1: i32) -> (i32, i32) {
    %c0_i32 = arith.constant 0 : i32
    %c0_i32_0 = arith.constant 0 : i32
    return %arg0, %c0_i32 : i32, i32
  }
  func.func @transform_2(%arg0: i32, %arg1: i32) -> (i32, i32, i32) {
    %c0_i32 = arith.constant 0 : i32
    %c0_i32_0 = arith.constant 0 : i32
    %c0_i32_1 = arith.constant 0 : i32
    return %arg0, %c0_i32, %c0_i32_0 : i32, i32, i32
  }
}

</mosaic_0001>

<llo_original>
// kernel: tpu_custom_call.1
$region0: #{tpu_custom_call.1}
  #allocation0 [shape = 'u32[]', space=smem, size = 0x4, offset = 0x4, fixed_abs, tag = 'smem constant byte address 0x4 - core index']
  #allocation1 [shape = 'u32[144,128]{1,0:T(1,128)}', space=vmem, size = 0x12000, scoped, tag = 'internal scratch']
  #allocation2 [shape = 'f32[8,1]{1,0:T(8,128)}', space=vmem, size = 0x1000, scoped, tag = 'scratch operand']
  #allocation3 [shape = 'f32[8,1]{1,0:T(8,128)}', space=vmem, size = 0x1000, scoped, tag = 'scratch operand']
  #allocation4 [shape = 'f32[8,1]{1,0:T(8,128)}', space=vmem, size = 0x1000, scoped, tag = 'scratch operand']
  #allocation5 [shape = 'f32[8,1]{1,0:T(8,128)}', space=vmem, size = 0x1000, scoped, tag = 'scratch operand']
  %s0 = inlined_call_operand.vmem [shape: f32[8,32], index: 0, kind: input, shape index: {}]
  %s1 = inlined_call_operand.vmem [shape: s32[8,1], index: 1, kind: input, shape index: {}]
  %s2 = inlined_call_operand.hbm [shape: f32[1,8,128], index: 2, kind: output, shape index: {}]
  %s3 = sld [smem:[#allocation0]]
  $region26: #{tpu_custom_call.1} parent=0
    _
  %s5 = ssub.s32 1, %s3
  %s6 = scalar_select 0, %s5, %s3
  $region1: #{tpu_custom_call.1} parent=0
    #allocation6 [shape = 'u8[4096]{0}', space=vmem, size = 0x1000, scoped, tag = 'output window, operand 0, single buffered']
    #allocation7 [shape = 's32[1]{0}', space=sflag, size = 0x4, scoped, tag = 'scoped memory for tpu_custom_call.1']
    %7 = vsyncpa [#allocation7], 0
    // Predicated region
    $region2: #{tpu_custom_call.1} parent=1 // pred_check
      _
    $region3: #{tpu_custom_call.1} parent=1 // pred_check_branch
      %9 = sbr.rel (0) target = $region5
    $region4: #{tpu_custom_call.1} parent=1 // pred_region
      _
    $region5: #{tpu_custom_call.1} parent=1 // pred_fallthru
      _
    // Predicated region
    $region6: #{tpu_custom_call.1} parent=1 // pred_check
      _
    $region7: #{tpu_custom_call.1} parent=1 // pred_check_branch
      %11 = sbr.rel (0) target = $region9
    $region8: #{tpu_custom_call.1} parent=1 // pred_region
      _
    $region9: #{tpu_custom_call.1} parent=1 // pred_fallthru
      _
    %p12 = scmp.eq.s32.totalorder 0, 0
    // Predicated region
    $region10: #{tpu_custom_call.1} parent=1 // pred_check
      %p13 = pneg %p12
    $region11: #{tpu_custom_call.1} parent=1 // pred_check_branch
      %15 = sbr.rel (%p13) target = $region13
    $region12: #{tpu_custom_call.1} parent=1 // pred_region
      %vm16 = vcmask 7168
      %17 = vst.msk [vmem:[#allocation2] sm:$0xff] %vm16, -inf
      %18 = vst.msk [vmem:[#allocation3] sm:$0xff] %vm16, 0.0
      %19 = vst.msk [vmem:[#allocation4] sm:$0xff] %vm16, 0.0
      %20 = vst.msk [vmem:[#allocation5] sm:$0xff] %vm16, 0.0
    $region13: #{tpu_custom_call.1} parent=1 // pred_fallthru
      _
    %v21 = vld [vmem:[%s0] sm:$0xff]
    %v22 = vld [vmem:[%s1] sm:$0xff]
    %v23 = vlaneseq
    %v24 = vand.u32 %v23, 127
    %s25 = smul.u32 0, 32
    %v26 = vstv %s25
    %v27 = vadd.s32 %v24, %v26
    %vm28 = vcmask 261120
    %v29 = vsel %vm28, %v21, -inf
    %30 = vmax.xlane.f32.xlu0 %v29
    %v31 = vpop.xlane.xlu0 %30
    %v32 = vld [vmem:[#allocation2] sm:$0xff]
    %v33 = vmax.f32 %v32, %v31
    %35 = vset.pattern.permute.xlu0 0
    %36 = vperm.xlu0 %35, %v33
    %v37 = vpop.permute.xlu0 %36
    %v39 = vsub.f32 %v21, %v37
    %v40 = vmul.f32 %v39, 1.442695
    %v41 = vpow.pop %v40
    %v42 = vsub.f32 %v32, %v33
    %v43 = vmul.f32 %v42, 1.442695
    %v44 = vpow.pop %v43
    %v45 = vld [vmem:[#allocation3] sm:$0xff]
    %v46 = vmul.f32 %v44, %v45
    %v47 = vsel %vm28, %v41, 0.0
    %48 = vadd.xlane.f32.xlu0 %v47
    %v49 = vpop.xlane.xlu0 %48
    %v50 = vadd.f32 %v46, %v49
    %vm51 = vcmask 7168
    %52 = vst.msk [vmem:[#allocation3] sm:$0xff] %vm51, %v50
    %v53 = vld [vmem:[#allocation4] sm:$0xff]
    %v54 = vsel %vm28, %v21, 0.0
    %55 = vadd.xlane.f32.xlu0 %v54
    %v56 = vpop.xlane.xlu0 %55
    %v57 = vadd.f32 %v53, %v56
    %58 = vst.msk [vmem:[#allocation4] sm:$0xff] %vm51, %v57
    %v59 = vld [vmem:[#allocation5] sm:$0xff]
    %60 = vset.pattern.permute.xlu0 0
    %61 = vperm.xlu0 %60, %v22
    %v62 = vpop.permute.xlu0 %61
    %vm63 = vcmp.eq.s32.totalorder %v27, %v62
    %v64 = vsel %vm63, %v21, 0.0
    %v65 = vsel %vm28, %v64, 0.0
    %66 = vadd.xlane.f32.xlu0 %v65
    %v67 = vpop.xlane.xlu0 %66
    %v68 = vadd.f32 %v59, %v67
    %69 = vst.msk [vmem:[#allocation5] sm:$0xff] %vm51, %v68
    %70 = vst.msk [vmem:[#allocation2] sm:$0xff] %vm51, %v33
    // Predicated region
    $region14: #{tpu_custom_call.1} parent=1 // pred_check
      %p71 = pneg %p12
    $region15: #{tpu_custom_call.1} parent=1 // pred_check_branch
      %73 = sbr.rel (%p71) target = $region17
    $region16: #{tpu_custom_call.1} parent=1 // pred_region
      %v74 = vld [vmem:[#allocation2] sm:$0xff]
      %v75 = vld [vmem:[#allocation3] sm:$0xff]
      %v76 = vlog2.pop %v75
      %v77 = vmul.f32 %v76, 0.6931472
      %v78 = vadd.f32 %v74, %v77
      %v79 = vld [vmem:[#allocation5] sm:$0xff]
      %v80 = vsub.f32 %v79, %v78
      %v81 = vld [vmem:[#allocation4] sm:$0xff]
      %v82 = vmul.f32 %v78, 32.0
      %v83 = vsub.f32 %v81, %v82
      %v84 = vmul.f32 %v80, -0.9
      %v85 = vmul.f32 %v83, 0.003125
      %v86 = vsub.f32 %v84, %v85
      %v87 = vsel %vm51, %v86, 0.0
      %88 = vadd.xlane.f32.xlu0 %v87
      %v89 = vpop.xlane.xlu0 %88
      %v90 = vrot.slane %v89, 4
      %v91 = vadd.f32 %v89, %v90
      %v92 = vrot.slane %v91, 2
      %v93 = vadd.f32 %v91, %v92
      %v94 = vrot.slane %v93, 1
      %v95 = vadd.f32 %v93, %v94
      %s96 = vtos %v95
      %v97 = vstv %s96
      %v98 = vadd.f32 %v97, 0.0
      %99 = vst [vmem:[#allocation6] sm:$0xff] %v98
    $region17: #{tpu_custom_call.1} parent=1 // pred_fallthru
      _
    // Predicated region
    $region18: #{tpu_custom_call.1} parent=1 // pred_check
      _
    $region19: #{tpu_custom_call.1} parent=1 // pred_check_branch
      %101 = sbr.rel (0) target = $region21
    $region20: #{tpu_custom_call.1} parent=1 // pred_region
      %s103 = ssub.s32 128, 128
      %104 = vsyncadd [#allocation7], %s103
      %s106 = sshll.u32 [#allocation6], 4
      %s107 = int_to_ptr.vmem [resolvable:$true] %s106
      %109 = dma.vmem_to_hbm [thread:$0]  %s107, 128, %s2, [#allocation7]
    $region21: #{tpu_custom_call.1} parent=1 // pred_fallthru
      _
    // Predicated region
    $region22: #{tpu_custom_call.1} parent=1 // pred_check
      _
    $region23: #{tpu_custom_call.1} parent=1 // pred_check_branch
      %111 = sbr.rel (0) target = $region25
    $region24: #{tpu_custom_call.1} parent=1 // pred_region
      %112 = dma.done [#allocation7], 128
    $region25: #{tpu_custom_call.1} parent=1 // pred_fallthru
      _
    %113 = vsyncpa [#allocation7], 1

</llo_original>
